<compile_context>
chip_gen: v6e
topology: v6e:2x2x1
jax: 0.10.0
libtpu: 0.0.40
codegen_flags: <defaults>
</compile_context>

<pallas_src>
import functools

import jax
import jax.numpy as jnp
import numpy as np
from jax.experimental import pallas as pl
from jax.experimental.pallas import tpu as pltpu


def _round_up(x, m):
    return (x + m - 1) // m * m


@functools.lru_cache(maxsize=None)
def _bilinear_matrix(out_size, in_size):
    """Interpolation matrix M (out, in): out_vec = M @ in_vec.  Matches
    PyTorch bilinear upsample with align_corners=False.  Host-side numpy."""
    i = np.arange(out_size, dtype=np.float64)
    src = (i + 0.5) * (in_size / out_size) - 0.5
    src = np.clip(src, 0.0, in_size - 1)
    lo = np.floor(src).astype(np.int64)
    hi = np.minimum(lo + 1, in_size - 1)
    frac = (src - lo).astype(np.float32)
    M = np.zeros((out_size, in_size), np.float32)
    rows = np.arange(out_size)
    np.add.at(M, (rows, lo), 1.0 - frac)
    np.add.at(M, (rows, hi), frac)
    return M


@functools.lru_cache(maxsize=None)
def _upsample_matrix_T(h, w, hin, win):
    """Fused separable bilinear matrix, transposed to (Hin*Win, h*w) so the
    pixel axis lands dense on lanes of the matmul output."""
    Wh = _bilinear_matrix(h, hin)                           # (h, Hin)
    Ww = _bilinear_matrix(w, win)                           # (w, Win)
    M = (Wh[:, None, :, None] * Ww[None, :, None, :]).reshape(h * w, hin * win)
    return np.ascontiguousarray(M.T)                        # (Hin*Win, h*w)


def pack_params(params, n_maps):
    """One-time host-side preprocessing of the shared-MLP parameters.

    Builds block-diagonal weights kron(I_N, W_i^T) so each MLP layer is a
    single matmul over all N maps, packs every layer into one lane-padded bf16
    weight slab and one f32 bias slab (2 DMAs total), and folds the uniform
    alpha = softmax(ones(N)) = 1/N into the first layer weight.

    Returns (wslab bf16, bslab f32, layer_meta) with layer_meta a static tuple
    of (row_offset, out_block, in_block) used for static slicing in-kernel.
    """
    alpha = 1.0 / float(n_maps)
    eye = np.eye(n_maps, dtype=np.float32)
    metas, w_blocks, b_blocks = [], [], []
    row, max_in = 0, 0
    for i, (W, b) in enumerate(params):
        Wt = np.asarray(W, np.float32).T                    # (out, in)
        if i == 0:
            Wt = Wt * alpha     # exact: reference scales the MLP input features
        out_d, in_d = Wt.shape
        metas.append((row, out_d * n_maps, in_d * n_maps))
        w_blocks.append(np.kron(eye, Wt))                   # (N*out, N*in)
        b_blocks.append(np.tile(np.asarray(b, np.float32).reshape(-1), n_maps))
        row += _round_up(out_d * n_maps, 8)
        max_in = max(max_in, in_d * n_maps)

    kpad = _round_up(max_in, 128)
    wslab = np.zeros((row, kpad), np.float32)
    bslab = np.zeros((row, 1), np.float32)
    for (r, ob, ib), Wblk, bblk in zip(metas, w_blocks, b_blocks):
        wslab[r:r + ob, :ib] = Wblk
        bslab[r:r + ob, 0] = bblk
    return (jnp.asarray(wslab, jnp.bfloat16),
            jnp.asarray(bslab, jnp.float32),
            tuple(metas))


def _make_kernel(layer_meta):
    num_layers = len(layer_meta)

    def kernel(x_ref, mt_ref, w_ref, b_ref, o_ref):
        # Fused bilinear upsample for all maps/channels at once:
        #   (N*C, Hin*Win) @ (Hin*Win, h*w) -> (N*C, h*w), pixels on lanes.
        a = jnp.dot(x_ref[...], mt_ref[...],
                    preferred_element_type=jnp.float32)

        # Shared MLP as block-diagonal matmuls: one bf16 dot per layer covers
        # every map; static sublane-aligned slices into the packed slabs.
        for i, (r, out_b, in_b) in enumerate(layer_meta):
            wi = w_ref[r:r + out_b, 0:in_b]                 # bf16 kron(I_N, W^T)
            bi = b_ref[r:r + out_b, :]                      # f32 (out_b, 1)
            a = jnp.dot(wi, a.astype(jnp.bfloat16),
                        preferred_element_type=jnp.float32) + bi
            if i < num_layers - 1:
                a = jnp.maximum(a, 0.0)                     # ReLU

        s = 1.0 / (1.0 + jnp.exp(-a))                       # Sigmoid, (N, h*w)

        # Per-map softmax over the h*w pixels.  s is in (0,1) so exp cannot
        # overflow -> no max subtraction; exact divide keeps each row == 1.
        e = jnp.exp(s)
        o_ref[...] = e / jnp.sum(e, axis=-1, keepdims=True)

    return kernel


@functools.partial(jax.jit, static_argnums=(1, 2, 5))
def _score_maps(x, h, w, wslab, bslab, layer_meta):
    N, C, Hin, Win = x.shape
    P = h * w
    # Compile-time constant interpolation matrix (numpy, cached) in bf16.
    MT = jnp.asarray(_upsample_matrix_T(h, w, Hin, Win), jnp.bfloat16)
    # Reshape/cast of the features fuses into this jit before the kernel.
    x2 = x.reshape(N * C, Hin * Win).astype(jnp.bfloat16)

    score = pl.pallas_call(
        _make_kernel(layer_meta),
        out_shape=jax.ShapeDtypeStruct((N, P), jnp.float32),
        in_specs=[pl.BlockSpec(memory_space=pltpu.MemorySpace.VMEM)] * 4,
        out_specs=pl.BlockSpec(memory_space=pltpu.MemorySpace.VMEM),
    )(x2, MT, wslab, bslab)
    # TODO(synk): if N or h*w ever scale up, reintroduce a grid over the map
    # axis with dimension_semantics=("parallel",) so both v7x TCs are used.
    return score.reshape(N, h, w)


def keypoint_scorer(features, h, w, packed_params):
    """features: tuple/list whose first element is (N, C, Hin, Win) NCHW.
    packed_params: output of pack_params(params, N).
    Returns (score_maps (N, h, w), alphas (N,))."""
    x = features[0]
    N = x.shape[0]
    wslab, bslab, meta = packed_params
    # betas are recreated as ones every forward -> alphas == softmax(ones) == 1/N
    # (already folded into the first layer weight at pack time).
    alphas = jnp.full((N,), 1.0 / N, jnp.float32)
    score_maps = _score_maps(x, h, w, wslab, bslab, meta)
    return score_maps, alphas


def init_mlp_params(key, input_dim, hidden_dims):
    dims = [input_dim] + list(hidden_dims) + [1]
    params = []
    for i in range(len(dims) - 1):
        key, k1, k2 = jax.random.split(key, 3)
        bound = 1.0 / (dims[i] ** 0.5)
        W = jax.random.uniform(k1, (dims[i], dims[i + 1]), jnp.float32,
                               -bound, bound)
        b = jax.random.uniform(k2, (dims[i + 1],), jnp.float32, -bound, bound)
        params.append((W, b))
    return params


if __name__ == "__main__":
    key = jax.random.PRNGKey(0)
    N, C, Hin, Win = 3, 4, 8, 8        # N maps, input_dim=4, 8x8 feature maps
    h, w = 16, 16                      # upsample target
    hidden_dims = [32, 16]

    key, kx = jax.random.split(key)
    x = jax.random.normal(kx, (N, C, Hin, Win), jnp.float32)
    params = init_mlp_params(key, C, hidden_dims)

    packed = pack_params(params, N)    # one-time host-side preprocessing
    features = (x,)                    # forward does features[0]

    score_maps, alphas = keypoint_scorer(features, h, w, packed)
    jax.block_until_ready((score_maps, alphas))

    assert score_maps.shape == (N, h, w)
    assert alphas.shape == (N,)
    # each score map is a softmax over its h*w pixels -> sums to 1
    assert bool(jnp.allclose(score_maps.sum(axis=(1, 2)), 1.0, atol=1e-3))
    assert bool(jnp.allclose(alphas, 1.0 / N, atol=1e-6))

    print("KERNEL_OK")
</pallas_src>

<mosaic_0001>
module attributes {stable_mosaic.version = 11 : i64} {
  func.func @kernel(%arg0: memref<12x64xbf16, #tpu.memory_space<vmem>>, %arg1: memref<64x256xbf16, #tpu.memory_space<vmem>>, %arg2: memref<152x128xbf16, #tpu.memory_space<vmem>>, %arg3: memref<152x1xf32, #tpu.memory_space<vmem>>, %arg4: memref<3x256xf32, #tpu.memory_space<vmem>>) attributes {dimension_semantics = [], scalar_prefetch = 0 : i64, scratch_operands = 0 : i64, tpu.core_type = #tpu.core_type<tc>} {
    %c0 = arith.constant 0 : index
    %c0_0 = arith.constant 0 : index
    %0 = vector.load %arg0[%c0, %c0_0] : memref<12x64xbf16, #tpu.memory_space<vmem>>, vector<12x64xbf16>
    %c0_1 = arith.constant 0 : index
    %c0_2 = arith.constant 0 : index
    %1 = vector.load %arg1[%c0_1, %c0_2] : memref<64x256xbf16, #tpu.memory_space<vmem>>, vector<64x256xbf16>
    %cst = arith.constant dense<0.000000e+00> : vector<12x256xf32>
    %2 = tpu.matmul %0, %1, %cst {dimension_numbers = #tpu.dot_dimension_numbers<[1], [0], [0], [1], [0, 0, 1, 1], [], []>} : vector<12x64xbf16>, vector<64x256xbf16>, vector<12x256xf32> -> vector<12x256xf32>
    %c0_3 = arith.constant 0 : index
    %c0_4 = arith.constant 0 : index
    %3 = vector.load %arg2[%c0_3, %c0_4] : memref<152x128xbf16, #tpu.memory_space<vmem>>, vector<96x12xbf16>
    %c0_5 = arith.constant 0 : index
    %c0_6 = arith.constant 0 : index
    %4 = vector.load %arg3[%c0_5, %c0_6] : memref<152x1xf32, #tpu.memory_space<vmem>>, vector<96x1xf32>
    %5 = arith.truncf %2 : vector<12x256xf32> to vector<12x256xbf16>
    %cst_7 = arith.constant dense<0.000000e+00> : vector<96x256xf32>
    %6 = tpu.matmul %3, %5, %cst_7 {dimension_numbers = #tpu.dot_dimension_numbers<[1], [0], [0], [1], [0, 0, 1, 1], [], []>} : vector<96x12xbf16>, vector<12x256xbf16>, vector<96x256xf32> -> vector<96x256xf32>
    %7 = vector.broadcast %4 : vector<96x1xf32> to vector<96x256xf32>
    %8 = arith.addf %6, %7 : vector<96x256xf32>
    %cst_8 = arith.constant 0.000000e+00 : f32
    %9 = vector.broadcast %cst_8 : f32 to vector<96x256xf32>
    %10 = arith.maximumf %8, %9 : vector<96x256xf32>
    %c96 = arith.constant 96 : index
    %c0_9 = arith.constant 0 : index
    %11 = vector.load %arg2[%c96, %c0_9] : memref<152x128xbf16, #tpu.memory_space<vmem>>, vector<48x96xbf16>
    %c96_10 = arith.constant 96 : index
    %c0_11 = arith.constant 0 : index
    %12 = vector.load %arg3[%c96_10, %c0_11] : memref<152x1xf32, #tpu.memory_space<vmem>>, vector<48x1xf32>
    %13 = arith.truncf %10 : vector<96x256xf32> to vector<96x256xbf16>
    %cst_12 = arith.constant dense<0.000000e+00> : vector<48x256xf32>
    %14 = tpu.matmul %11, %13, %cst_12 {dimension_numbers = #tpu.dot_dimension_numbers<[1], [0], [0], [1], [0, 0, 1, 1], [], []>} : vector<48x96xbf16>, vector<96x256xbf16>, vector<48x256xf32> -> vector<48x256xf32>
    %15 = vector.broadcast %12 : vector<48x1xf32> to vector<48x256xf32>
    %16 = arith.addf %14, %15 : vector<48x256xf32>
    %cst_13 = arith.constant 0.000000e+00 : f32
    %17 = vector.broadcast %cst_13 : f32 to vector<48x256xf32>
    %18 = arith.maximumf %16, %17 : vector<48x256xf32>
    %c144 = arith.constant 144 : index
    %c0_14 = arith.constant 0 : index
    %19 = vector.load %arg2[%c144, %c0_14] : memref<152x128xbf16, #tpu.memory_space<vmem>>, vector<3x48xbf16>
    %c144_15 = arith.constant 144 : index
    %c0_16 = arith.constant 0 : index
    %20 = vector.load %arg3[%c144_15, %c0_16] : memref<152x1xf32, #tpu.memory_space<vmem>>, vector<3x1xf32>
    %21 = arith.truncf %18 : vector<48x256xf32> to vector<48x256xbf16>
    %cst_17 = arith.constant dense<0.000000e+00> : vector<3x256xf32>
    %22 = tpu.matmul %19, %21, %cst_17 {dimension_numbers = #tpu.dot_dimension_numbers<[1], [0], [0], [1], [0, 0, 1, 1], [], []>} : vector<3x48xbf16>, vector<48x256xbf16>, vector<3x256xf32> -> vector<3x256xf32>
    %23 = vector.broadcast %20 : vector<3x1xf32> to vector<3x256xf32>
    %24 = arith.addf %22, %23 : vector<3x256xf32>
    %cst_18 = arith.constant 0.000000e+00 : f32
    %25 = vector.broadcast %cst_18 : f32 to vector<3x256xf32>
    %26 = arith.subf %25, %24 : vector<3x256xf32>
    %27 = math.exp %26 : vector<3x256xf32>
    %cst_19 = arith.constant 1.000000e+00 : f32
    %28 = vector.broadcast %cst_19 : f32 to vector<3x256xf32>
    %29 = arith.addf %28, %27 : vector<3x256xf32>
    %cst_20 = arith.constant 1.000000e+00 : f32
    %30 = vector.broadcast %cst_20 : f32 to vector<3x256xf32>
    %31 = arith.divf %30, %29 : vector<3x256xf32>
    %32 = math.exp %31 : vector<3x256xf32>
    %cst_21 = arith.constant dense<0.000000e+00> : vector<3xf32>
    %33 = vector.multi_reduction <add>, %32, %cst_21 [1] : vector<3x256xf32> to vector<3xf32>
    %34 = vector.shape_cast %33 : vector<3xf32> to vector<3x1xf32>
    %35 = vector.broadcast %34 : vector<3x1xf32> to vector<3x256xf32>
    %36 = arith.divf %32, %35 : vector<3x256xf32>
    %c0_22 = arith.constant 0 : index
    %c0_23 = arith.constant 0 : index
    %37 = vector.load %arg4[%c0_22, %c0_23] : memref<3x256xf32, #tpu.memory_space<vmem>>, vector<3x256xf32>
    tpu.vector_store %arg4[%c0_22, %c0_23], %36 {strides = array<i32>} : memref<3x256xf32, #tpu.memory_space<vmem>>, vector<3x256xf32>,
    return
  }
}

</mosaic_0001>

<llo_original>
// kernel: _score_maps.1
$region0: #{_score_maps.1}
  #allocation0 [shape = 'u32[]', space=smem, size = 0x4, offset = 0x4, fixed_abs, tag = 'smem constant byte address 0x4 - core index']
  #allocation1 [shape = 'u32[144,128]{1,0:T(1,128)}', space=vmem, size = 0x12000, scoped, tag = 'internal scratch']
  %s0 = inlined_call_operand.vmem [shape: bf16[12,64], index: 0, kind: input, shape index: {}]
  %s1 = inlined_call_operand.vmem [shape: bf16[64,256], index: 1, kind: input, shape index: {}]
  %s2 = inlined_call_operand.vmem [shape: bf16[152,128], index: 2, kind: input, shape index: {}]
  %s3 = inlined_call_operand.vmem [shape: f32[152,1], index: 3, kind: input, shape index: {}]
  %s4 = inlined_call_operand.vmem [shape: f32[3,256], index: 4, kind: output, shape index: {}]
  %s5 = sld [smem:[#allocation0]]
  $region26: #{_score_maps.1} parent=0
    _
  %s7 = ssub.s32 1, %s5
  %s8 = scalar_select 0, %s7, %s5
  // Predicated region
  $region2: #{_score_maps.1} parent=0 // pred_check
    _
  $region3: #{_score_maps.1} parent=0 // pred_check_branch
    %10 = sbr.rel (0) target = $region5
  $region4: #{_score_maps.1} parent=0 // pred_region
    _
  $region5: #{_score_maps.1} parent=0 // pred_fallthru
    _
  // Predicated region
  $region6: #{_score_maps.1} parent=0 // pred_check
    _
  $region7: #{_score_maps.1} parent=0 // pred_check_branch
    %12 = sbr.rel (0) target = $region9
  $region8: #{_score_maps.1} parent=0 // pred_region
    _
  $region9: #{_score_maps.1} parent=0 // pred_fallthru
    _
  // Predicated region
  $region10: #{_score_maps.1} parent=0 // pred_check
    _
  $region11: #{_score_maps.1} parent=0 // pred_check_branch
    %14 = sbr.rel (0) target = $region13
  $region12: #{_score_maps.1} parent=0 // pred_region
    _
  $region13: #{_score_maps.1} parent=0 // pred_fallthru
    _
  // Predicated region
  $region14: #{_score_maps.1} parent=0 // pred_check
    _
  $region15: #{_score_maps.1} parent=0 // pred_check_branch
    %16 = sbr.rel (0) target = $region17
  $region16: #{_score_maps.1} parent=0 // pred_region
    _
  $region17: #{_score_maps.1} parent=0 // pred_fallthru
    _
  %v18 = vld [vmem:[%s0] sm:$0xf]
  %v19 = vld [vmem:[%s0 + $0x4] sm:$0x3]
  %v20 = vld [vmem:[%s1] sm:$0xff]
  %v21 = vld [vmem:[%s1 + $0x8] sm:$0xff]
  %v22 = vld [vmem:[%s1 + $0x10] sm:$0xff]
  %v23 = vld [vmem:[%s1 + $0x18] sm:$0xff]
  %v24 = vld [vmem:[%s1 + $0x20] sm:$0xff]
  %v25 = vld [vmem:[%s1 + $0x28] sm:$0xff]
  %v26 = vld [vmem:[%s1 + $0x30] sm:$0xff]
  %v27 = vld [vmem:[%s1 + $0x38] sm:$0xff]
  %v30 = vunpack.c.l.b16 %v18
  %v31 = vunpack.c.l.b16 %v19
  %v32 = vpack.c.b16 %v31, %v30
  %v41 = vunpack.c.l.b16 %v20
  %v42 = vunpack.c.h.b16 %v20
  %v43 = vunpack.c.l.b16 %v21
  %v44 = vunpack.c.h.b16 %v21
  %v45 = vunpack.c.l.b16 %v22
  %v46 = vunpack.c.h.b16 %v22
  %v47 = vunpack.c.l.b16 %v23
  %v48 = vunpack.c.h.b16 %v23
  %v49 = vunpack.c.l.b16 %v24
  %v50 = vunpack.c.h.b16 %v24
  %v51 = vunpack.c.l.b16 %v25
  %v52 = vunpack.c.h.b16 %v25
  %v53 = vunpack.c.l.b16 %v26
  %v54 = vunpack.c.h.b16 %v26
  %v55 = vunpack.c.l.b16 %v27
  %v56 = vunpack.c.h.b16 %v27
  %v57 = vpack.c.b16 %v43, %v41
  %v58 = vpack.c.b16 %v44, %v42
  %v59 = vpack.c.b16 %v47, %v45
  %v60 = vpack.c.b16 %v48, %v46
  %v61 = vpack.c.b16 %v51, %v49
  %v62 = vpack.c.b16 %v52, %v50
  %v63 = vpack.c.b16 %v55, %v53
  %v64 = vpack.c.b16 %v56, %v54
  %vm73 = vcmask 523264
  %v75 = vsel %vm73, %v32, 0
  %77 = vmatprep.subr.bf16.mxu0 0
  %78 = vmatpush1.bf16.msra.mxu0 0
  %79 = vmatprep.subr.bf16.mxu0 0
  %80 = vmatpush1.bf16.msra.mxu0 0
  %81 = vmatprep.subr.bf16.mxu0 0
  %82 = vmatpush1.bf16.msra.mxu0 0
  %83 = vmatprep.subr.bf16.mxu0 0
  %84 = vmatpush1.bf16.msra.mxu0 0
  %85 = vmatprep.subr.bf16.mxu0 %v64
  %86 = vmatpush1.bf16.msra.mxu0 %v63
  %87 = vmatprep.subr.bf16.mxu0 %v62
  %88 = vmatpush1.bf16.msra.mxu0 %v61
  %89 = vmatprep.subr.bf16.mxu0 %v60
  %90 = vmatpush1.bf16.msra.mxu0 %v59
  %91 = vmatprep.subr.bf16.mxu0 %v58
  %92 = vmatpush1.bf16.msra.mxu0 %v57
  %93 = vmatprep.subr.bf16.mxu0 0
  %94 = vmatpush2.bf16.msra.mxu0 0
  %95 = vmatprep.subr.bf16.mxu0 0
  %96 = vmatpush2.bf16.msra.mxu0 0
  %97 = vmatprep.subr.bf16.mxu0 0
  %98 = vmatpush2.bf16.msra.mxu0 0
  %99 = vmatprep.subr.bf16.mxu0 0
  %100 = vmatpush2.bf16.msra.mxu0 0
  %101 = vmatprep.subr.bf16.mxu0 0
  %102 = vmatpush2.bf16.msra.mxu0 0
  %103 = vmatprep.subr.bf16.mxu0 0
  %104 = vmatpush2.bf16.msra.mxu0 0
  %105 = vmatprep.subr.bf16.mxu0 0
  %106 = vmatpush2.bf16.msra.mxu0 0
  %107 = vmatprep.subr.bf16.mxu0 0
  %108 = vmatpush2.bf16.msra.mxu0 0
  %109 = vmatprep.mubr.bf16.mxu0 0
  %110 = vmatmul.mubr.bf16.gmra.mxu0 %v75
  %v111 = vpop.f32.mrf.mxu0
  %v112 = vadd.f32 0.0, %v111
  %v113 = vpop.f32.mrf.mxu0
  %v114 = vadd.f32 0.0, %v113
  %v115 = vpop.f32.mrf.mxu0
  %v116 = vadd.f32 0.0, %v115
  %v117 = vpop.f32.mrf.mxu0
  %v118 = vadd.f32 0.0, %v117
  %119 = vdwg.mxu0
  %v120 = vld [vmem:[%s2] sm:$0xf]
  %v121 = vld [vmem:[%s2 + $0x4] sm:$0xf]
  %v122 = vld [vmem:[%s2 + $0x8] sm:$0xf]
  %v123 = vld [vmem:[%s2 + $0xc] sm:$0xf]
  %v124 = vld [vmem:[%s2 + $0x10] sm:$0xf]
  %v125 = vld [vmem:[%s2 + $0x14] sm:$0xf]
  %v126 = vld [vmem:[%s2 + $0x18] sm:$0xf]
  %v127 = vld [vmem:[%s2 + $0x1c] sm:$0xf]
  %v128 = vld [vmem:[%s2 + $0x20] sm:$0xf]
  %v129 = vld [vmem:[%s2 + $0x24] sm:$0xf]
  %v130 = vld [vmem:[%s2 + $0x28] sm:$0xf]
  %v131 = vld [vmem:[%s2 + $0x2c] sm:$0xf]
  %v132 = vld [vmem:[%s3] sm:$0xff]
  %v133 = vld [vmem:[%s3 + $0x8] sm:$0xff]
  %v134 = vld [vmem:[%s3 + $0x10] sm:$0xff]
  %v135 = vld [vmem:[%s3 + $0x18] sm:$0xff]
  %v136 = vld [vmem:[%s3 + $0x20] sm:$0xff]
  %v137 = vld [vmem:[%s3 + $0x28] sm:$0xff]
  %v138 = vld [vmem:[%s3 + $0x30] sm:$0xff]
  %v139 = vld [vmem:[%s3 + $0x38] sm:$0xff]
  %v140 = vld [vmem:[%s3 + $0x40] sm:$0xff]
  %v141 = vld [vmem:[%s3 + $0x48] sm:$0xff]
  %v142 = vld [vmem:[%s3 + $0x50] sm:$0xff]
  %v143 = vld [vmem:[%s3 + $0x58] sm:$0xff]
  %v144 = vpack.c.bf16 %v116, %v112
  %v145 = vpack.c.bf16 %v118, %v114
  %147 = vset.pattern.permute.xlu0 0
  %148 = vperm.xlu0 %147, %v132
  %v149 = vpop.permute.xlu0 %148
  %152 = vset.pattern.permute.xlu0 0
  %153 = vperm.xlu0 %152, %v133
  %v154 = vpop.permute.xlu0 %153
  %157 = vset.pattern.permute.xlu0 0
  %158 = vperm.xlu0 %157, %v134
  %v159 = vpop.permute.xlu0 %158
  %162 = vset.pattern.permute.xlu0 0
  %163 = vperm.xlu0 %162, %v135
  %v164 = vpop.permute.xlu0 %163
  %167 = vset.pattern.permute.xlu0 0
  %168 = vperm.xlu0 %167, %v136
  %v169 = vpop.permute.xlu0 %168
  %172 = vset.pattern.permute.xlu0 0
  %173 = vperm.xlu0 %172, %v137
  %v174 = vpop.permute.xlu0 %173
  %177 = vset.pattern.permute.xlu0 0
  %178 = vperm.xlu0 %177, %v138
  %v179 = vpop.permute.xlu0 %178
  %182 = vset.pattern.permute.xlu0 0
  %183 = vperm.xlu0 %182, %v139
  %v184 = vpop.permute.xlu0 %183
  %187 = vset.pattern.permute.xlu0 0
  %188 = vperm.xlu0 %187, %v140
  %v189 = vpop.permute.xlu0 %188
  %192 = vset.pattern.permute.xlu0 0
  %193 = vperm.xlu0 %192, %v141
  %v194 = vpop.permute.xlu0 %193
  %197 = vset.pattern.permute.xlu0 0
  %198 = vperm.xlu0 %197, %v142
  %v199 = vpop.permute.xlu0 %198
  %202 = vset.pattern.permute.xlu0 0
  %203 = vperm.xlu0 %202, %v143
  %v204 = vpop.permute.xlu0 %203
  %v218 = vunpack.c.l.b16 %v120
  %v219 = vunpack.c.l.b16 %v121
  %v220 = vunpack.c.l.b16 %v122
  %v221 = vunpack.c.l.b16 %v123
  %v222 = vunpack.c.l.b16 %v124
  %v223 = vunpack.c.l.b16 %v125
  %v224 = vunpack.c.l.b16 %v126
  %v225 = vunpack.c.l.b16 %v127
  %v226 = vunpack.c.l.b16 %v128
  %v227 = vunpack.c.l.b16 %v129
  %v228 = vunpack.c.l.b16 %v130
  %v229 = vunpack.c.l.b16 %v131
  %v230 = vpack.c.b16 %v219, %v218
  %v231 = vpack.c.b16 %v221, %v220
  %v232 = vpack.c.b16 %v223, %v222
  %v233 = vpack.c.b16 %v225, %v224
  %v234 = vpack.c.b16 %v227, %v226
  %v235 = vpack.c.b16 %v229, %v228
  %vm236 = vcmask 97280
  %v238 = vsel %vm236, %v230, 0
  %v241 = vsel %vm236, %v231, 0
  %v244 = vsel %vm236, %v232, 0
  %v247 = vsel %vm236, %v233, 0
  %v250 = vsel %vm236, %v234, 0
  %v253 = vsel %vm236, %v235, 0
  %vm255 = vcmask 1045504
  %v257 = vsel %vm255, %v144, 0
  %v260 = vsel %vm255, %v145, 0
  %262 = vmatprep.subr.bf16.mxu0 0
  %263 = vmatpush1.bf16.msra.mxu0 0
  %264 = vmatprep.subr.bf16.mxu0 0
  %265 = vmatpush1.bf16.msra.mxu0 0
  %266 = vmatprep.subr.bf16.mxu0 0
  %267 = vmatpush1.bf16.msra.mxu0 0
  %268 = vmatprep.subr.bf16.mxu0 0
  %269 = vmatpush1.bf16.msra.mxu0 0
  %270 = vmatprep.subr.bf16.mxu0 0
  %271 = vmatpush1.bf16.msra.mxu0 0
  %272 = vmatprep.subr.bf16.mxu0 0
  %273 = vmatpush1.bf16.msra.mxu0 0
  %274 = vmatprep.subr.bf16.mxu0 0
  %275 = vmatpush1.bf16.msra.mxu0 0
  %276 = vmatprep.subr.bf16.mxu0 %v260
  %277 = vmatpush1.bf16.msra.mxu0 %v257
  %278 = vmatprep.subr.bf16.mxu0 0
  %279 = vmatpush2.bf16.msra.mxu0 0
  %280 = vmatprep.subr.bf16.mxu0 0
  %281 = vmatpush2.bf16.msra.mxu0 0
  %282 = vmatprep.subr.bf16.mxu0 0
  %283 = vmatpush2.bf16.msra.mxu0 0
  %284 = vmatprep.subr.bf16.mxu0 0
  %285 = vmatpush2.bf16.msra.mxu0 0
  %286 = vmatprep.subr.bf16.mxu0 0
  %287 = vmatpush2.bf16.msra.mxu0 0
  %288 = vmatprep.subr.bf16.mxu0 0
  %289 = vmatpush2.bf16.msra.mxu0 0
  %290 = vmatprep.subr.bf16.mxu0 0
  %291 = vmatpush2.bf16.msra.mxu0 0
  %292 = vmatprep.subr.bf16.mxu0 0
  %293 = vmatpush2.bf16.msra.mxu0 0
  %294 = vmatprep.mubr.bf16.mxu0 0
  %295 = vmatmul.mubr.bf16.gmra.mxu0 %v238
  %v296 = vpop.f32.mrf.mxu0
  %v297 = vadd.f32 %v149, %v296
  %v298 = vpop.f32.mrf.mxu0
  %v299 = vadd.f32 %v149, %v298
  %v300 = vpop.f32.mrf.mxu0
  %v301 = vadd.f32 %v154, %v300
  %v302 = vpop.f32.mrf.mxu0
  %v303 = vadd.f32 %v154, %v302
  %304 = vmatprep.mubr.bf16.mxu0 0
  %305 = vmatmul.mubr.bf16.gmra.mxu0 %v241
  %v306 = vpop.f32.mrf.mxu0
  %v307 = vadd.f32 %v159, %v306
  %v308 = vpop.f32.mrf.mxu0
  %v309 = vadd.f32 %v159, %v308
  %v310 = vpop.f32.mrf.mxu0
  %v311 = vadd.f32 %v164, %v310
  %v312 = vpop.f32.mrf.mxu0
  %v313 = vadd.f32 %v164, %v312
  %314 = vmatprep.mubr.bf16.mxu0 0
  %315 = vmatmul.mubr.bf16.gmra.mxu0 %v244
  %v316 = vpop.f32.mrf.mxu0
  %v317 = vadd.f32 %v169, %v316
  %v318 = vpop.f32.mrf.mxu0
  %v319 = vadd.f32 %v169, %v318
  %v320 = vpop.f32.mrf.mxu0
  %v321 = vadd.f32 %v174, %v320
  %v322 = vpop.f32.mrf.mxu0
  %v323 = vadd.f32 %v174, %v322
  %324 = vmatprep.mubr.bf16.mxu0 0
  %325 = vmatmul.mubr.bf16.gmra.mxu0 %v247
  %v326 = vpop.f32.mrf.mxu0
  %v327 = vadd.f32 %v179, %v326
  %v328 = vpop.f32.mrf.mxu0
  %v329 = vadd.f32 %v179, %v328
  %v330 = vpop.f32.mrf.mxu0
  %v331 = vadd.f32 %v184, %v330
  %v332 = vpop.f32.mrf.mxu0
  %v333 = vadd.f32 %v184, %v332
  %334 = vmatprep.mubr.bf16.mxu0 0
  %335 = vmatmul.mubr.bf16.gmra.mxu0 %v250
  %v336 = vpop.f32.mrf.mxu0
  %v337 = vadd.f32 %v189, %v336
  %v338 = vpop.f32.mrf.mxu0
  %v339 = vadd.f32 %v189, %v338
  %v340 = vpop.f32.mrf.mxu0
  %v341 = vadd.f32 %v194, %v340
  %v342 = vpop.f32.mrf.mxu0
  %v343 = vadd.f32 %v194, %v342
  %344 = vmatprep.mubr.bf16.mxu0 0
  %345 = vmatmul.mubr.bf16.gmra.mxu0 %v253
  %v346 = vpop.f32.mrf.mxu0
  %v347 = vadd.f32 %v199, %v346
  %v348 = vpop.f32.mrf.mxu0
  %v349 = vadd.f32 %v199, %v348
  %v350 = vpop.f32.mrf.mxu0
  %v351 = vadd.f32 %v204, %v350
  %v352 = vpop.f32.mrf.mxu0
  %v353 = vadd.f32 %v204, %v352
  %354 = vdwg.mxu0
  %v355 = vmax.f32 %v297, 0.0
  %v356 = vmax.f32 %v299, 0.0
  %v357 = vmax.f32 %v301, 0.0
  %v358 = vmax.f32 %v303, 0.0
  %v359 = vmax.f32 %v307, 0.0
  %v360 = vmax.f32 %v309, 0.0
  %v361 = vmax.f32 %v311, 0.0
  %v362 = vmax.f32 %v313, 0.0
  %v363 = vmax.f32 %v317, 0.0
  %v364 = vmax.f32 %v319, 0.0
  %v365 = vmax.f32 %v321, 0.0
  %v366 = vmax.f32 %v323, 0.0
  %v367 = vmax.f32 %v327, 0.0
  %v368 = vmax.f32 %v329, 0.0
  %v369 = vmax.f32 %v331, 0.0
  %v370 = vmax.f32 %v333, 0.0
  %v371 = vmax.f32 %v337, 0.0
  %v372 = vmax.f32 %v339, 0.0
  %v373 = vmax.f32 %v341, 0.0
  %v374 = vmax.f32 %v343, 0.0
  %v375 = vmax.f32 %v347, 0.0
  %v376 = vmax.f32 %v349, 0.0
  %v377 = vmax.f32 %v351, 0.0
  %v378 = vmax.f32 %v353, 0.0
  %v379 = vld [vmem:[%s2 + $0x30] sm:$0xf]
  %v380 = vld [vmem:[%s2 + $0x34] sm:$0xf]
  %v381 = vld [vmem:[%s2 + $0x38] sm:$0xf]
  %v382 = vld [vmem:[%s2 + $0x3c] sm:$0xf]
  %v383 = vld [vmem:[%s2 + $0x40] sm:$0xf]
  %v384 = vld [vmem:[%s2 + $0x44] sm:$0xf]
  %v385 = vld [vmem:[%s3 + $0x60] sm:$0xff]
  %v386 = vld [vmem:[%s3 + $0x68] sm:$0xff]
  %v387 = vld [vmem:[%s3 + $0x70] sm:$0xff]
  %v388 = vld [vmem:[%s3 + $0x78] sm:$0xff]
  %v389 = vld [vmem:[%s3 + $0x80] sm:$0xff]
  %v390 = vld [vmem:[%s3 + $0x88] sm:$0xff]
  %v391 = vpack.c.bf16 %v357, %v355
  %v392 = vpack.c.bf16 %v358, %v356
  %v393 = vpack.c.bf16 %v361, %v359
  %v394 = vpack.c.bf16 %v362, %v360
  %v395 = vpack.c.bf16 %v365, %v363
  %v396 = vpack.c.bf16 %v366, %v364
  %v397 = vpack.c.bf16 %v369, %v367
  %v398 = vpack.c.bf16 %v370, %v368
  %v399 = vpack.c.bf16 %v373, %v371
  %v400 = vpack.c.bf16 %v374, %v372
  %v401 = vpack.c.bf16 %v377, %v375
  %v402 = vpack.c.bf16 %v378, %v376
  %404 = vset.pattern.permute.xlu0 0
  %405 = vperm.xlu0 %404, %v385
  %v406 = vpop.permute.xlu0 %405
  %409 = vset.pattern.permute.xlu0 0
  %410 = vperm.xlu0 %409, %v386
  %v411 = vpop.permute.xlu0 %410
  %414 = vset.pattern.permute.xlu0 0
  %415 = vperm.xlu0 %414, %v387
  %v416 = vpop.permute.xlu0 %415
  %419 = vset.pattern.permute.xlu0 0
  %420 = vperm.xlu0 %419, %v388
  %v421 = vpop.permute.xlu0 %420
  %424 = vset.pattern.permute.xlu0 0
  %425 = vperm.xlu0 %424, %v389
  %v426 = vpop.permute.xlu0 %425
  %429 = vset.pattern.permute.xlu0 0
  %430 = vperm.xlu0 %429, %v390
  %v431 = vpop.permute.xlu0 %430
  %v439 = vunpack.c.l.b16 %v379
  %v440 = vunpack.c.l.b16 %v380
  %v441 = vunpack.c.l.b16 %v381
  %v442 = vunpack.c.l.b16 %v382
  %v443 = vunpack.c.l.b16 %v383
  %v444 = vunpack.c.l.b16 %v384
  %v445 = vpack.c.b16 %v440, %v439
  %v446 = vpack.c.b16 %v442, %v441
  %v447 = vpack.c.b16 %v444, %v443
  %vm448 = vcmask 785408
  %v450 = vsel %vm448, %v445, 0
  %v453 = vsel %vm448, %v446, 0
  %v456 = vsel %vm448, %v447, 0
  %458 = vmatprep.subr.bf16.mxu0 0
  %459 = vmatpush1.bf16.msra.mxu0 0
  %460 = vmatprep.subr.bf16.mxu0 0
  %461 = vmatpush1.bf16.msra.mxu0 0
  %462 = vmatprep.subr.bf16.mxu0 %v402
  %463 = vmatpush1.bf16.msra.mxu0 %v401
  %464 = vmatprep.subr.bf16.mxu0 %v400
  %465 = vmatpush1.bf16.msra.mxu0 %v399
  %466 = vmatprep.subr.bf16.mxu0 %v398
  %467 = vmatpush1.bf16.msra.mxu0 %v397
  %468 = vmatprep.subr.bf16.mxu0 %v396
  %469 = vmatpush1.bf16.msra.mxu0 %v395
  %470 = vmatprep.subr.bf16.mxu0 %v394
  %471 = vmatpush1.bf16.msra.mxu0 %v393
  %472 = vmatprep.subr.bf16.mxu0 %v392
  %473 = vmatpush1.bf16.msra.mxu0 %v391
  %474 = vmatprep.subr.bf16.mxu0 0
  %475 = vmatpush2.bf16.msra.mxu0 0
  %476 = vmatprep.subr.bf16.mxu0 0
  %477 = vmatpush2.bf16.msra.mxu0 0
  %478 = vmatprep.subr.bf16.mxu0 0
  %479 = vmatpush2.bf16.msra.mxu0 0
  %480 = vmatprep.subr.bf16.mxu0 0
  %481 = vmatpush2.bf16.msra.mxu0 0
  %482 = vmatprep.subr.bf16.mxu0 0
  %483 = vmatpush2.bf16.msra.mxu0 0
  %484 = vmatprep.subr.bf16.mxu0 0
  %485 = vmatpush2.bf16.msra.mxu0 0
  %486 = vmatprep.subr.bf16.mxu0 0
  %487 = vmatpush2.bf16.msra.mxu0 0
  %488 = vmatprep.subr.bf16.mxu0 0
  %489 = vmatpush2.bf16.msra.mxu0 0
  %490 = vmatprep.mubr.bf16.mxu0 0
  %491 = vmatmul.mubr.bf16.gmra.mxu0 %v450
  %v492 = vpop.f32.mrf.mxu0
  %v493 = vadd.f32 %v406, %v492
  %v494 = vpop.f32.mrf.mxu0
  %v495 = vadd.f32 %v406, %v494
  %v496 = vpop.f32.mrf.mxu0
  %v497 = vadd.f32 %v411, %v496
  %v498 = vpop.f32.mrf.mxu0
  %v499 = vadd.f32 %v411, %v498
  %500 = vmatprep.mubr.bf16.mxu0 0
  %501 = vmatmul.mubr.bf16.gmra.mxu0 %v453
  %v502 = vpop.f32.mrf.mxu0
  %v503 = vadd.f32 %v416, %v502
  %v504 = vpop.f32.mrf.mxu0
  %v505 = vadd.f32 %v416, %v504
  %v506 = vpop.f32.mrf.mxu0
  %v507 = vadd.f32 %v421, %v506
  %v508 = vpop.f32.mrf.mxu0
  %v509 = vadd.f32 %v421, %v508
  %510 = vmatprep.mubr.bf16.mxu0 0
  %511 = vmatmul.mubr.bf16.gmra.mxu0 %v456
  %v512 = vpop.f32.mrf.mxu0
  %v513 = vadd.f32 %v426, %v512
  %v514 = vpop.f32.mrf.mxu0
  %v515 = vadd.f32 %v426, %v514
  %v516 = vpop.f32.mrf.mxu0
  %v517 = vadd.f32 %v431, %v516
  %v518 = vpop.f32.mrf.mxu0
  %v519 = vadd.f32 %v431, %v518
  %520 = vdwg.mxu0
  %v521 = vmax.f32 %v493, 0.0
  %v522 = vmax.f32 %v495, 0.0
  %v523 = vmax.f32 %v497, 0.0
  %v524 = vmax.f32 %v499, 0.0
  %v525 = vmax.f32 %v503, 0.0
  %v526 = vmax.f32 %v505, 0.0
  %v527 = vmax.f32 %v507, 0.0
  %v528 = vmax.f32 %v509, 0.0
  %v529 = vmax.f32 %v513, 0.0
  %v530 = vmax.f32 %v515, 0.0
  %v531 = vmax.f32 %v517, 0.0
  %v532 = vmax.f32 %v519, 0.0
  %v533 = vld [vmem:[%s2 + $0x48] sm:$0x3]
  %v534 = vld [vmem:[%s3 + $0x90] sm:$0x7]
  %v535 = vpack.c.bf16 %v523, %v521
  %v536 = vpack.c.bf16 %v524, %v522
  %v537 = vpack.c.bf16 %v527, %v525
  %v538 = vpack.c.bf16 %v528, %v526
  %v539 = vpack.c.bf16 %v531, %v529
  %v540 = vpack.c.bf16 %v532, %v530
  %542 = vset.pattern.permute.xlu0 0
  %543 = vperm.xlu0 %542, %v534
  %v544 = vpop.permute.xlu0 %543
  %vm546 = vcmask 392192
  %v548 = vsel %vm546, %v533, 0
  %550 = vmatprep.subr.bf16.mxu0 0
  %551 = vmatpush1.bf16.msra.mxu0 0
  %552 = vmatprep.subr.bf16.mxu0 0
  %553 = vmatpush1.bf16.msra.mxu0 0
  %554 = vmatprep.subr.bf16.mxu0 0
  %555 = vmatpush1.bf16.msra.mxu0 0
  %556 = vmatprep.subr.bf16.mxu0 0
  %557 = vmatpush1.bf16.msra.mxu0 0
  %558 = vmatprep.subr.bf16.mxu0 0
  %559 = vmatpush1.bf16.msra.mxu0 0
  %560 = vmatprep.subr.bf16.mxu0 %v540
  %561 = vmatpush1.bf16.msra.mxu0 %v539
  %562 = vmatprep.subr.bf16.mxu0 %v538
  %563 = vmatpush1.bf16.msra.mxu0 %v537
  %564 = vmatprep.subr.bf16.mxu0 %v536
  %565 = vmatpush1.bf16.msra.mxu0 %v535
  %566 = vmatprep.subr.bf16.mxu0 0
  %567 = vmatpush2.bf16.msra.mxu0 0
  %568 = vmatprep.subr.bf16.mxu0 0
  %569 = vmatpush2.bf16.msra.mxu0 0
  %570 = vmatprep.subr.bf16.mxu0 0
  %571 = vmatpush2.bf16.msra.mxu0 0
  %572 = vmatprep.subr.bf16.mxu0 0
  %573 = vmatpush2.bf16.msra.mxu0 0
  %574 = vmatprep.subr.bf16.mxu0 0
  %575 = vmatpush2.bf16.msra.mxu0 0
  %576 = vmatprep.subr.bf16.mxu0 0
  %577 = vmatpush2.bf16.msra.mxu0 0
  %578 = vmatprep.subr.bf16.mxu0 0
  %579 = vmatpush2.bf16.msra.mxu0 0
  %580 = vmatprep.subr.bf16.mxu0 0
  %581 = vmatpush2.bf16.msra.mxu0 0
  %582 = vmatprep.mubr.bf16.mxu0 0
  %583 = vmatmul.mubr.bf16.gmra.mxu0 %v548
  %v584 = vpop.f32.mrf.mxu0
  %v585 = vadd.f32 %v544, %v584
  %v586 = vpop.f32.mrf.mxu0
  %v587 = vadd.f32 %v544, %v586
  %v588 = vpop.f32.mrf.mxu0
  %v589 = vpop.f32.mrf.mxu0
  %590 = vdwg.mxu0
  %v591 = vsub.f32 0.0, %v585
  %v592 = vsub.f32 0.0, %v587
  %v593 = vmul.f32 %v591, 1.442695
  %v594 = vpow.pop %v593
  %v595 = vmul.f32 %v592, 1.442695
  %v596 = vpow.pop %v595
  %v597 = vadd.f32 %v594, 1.0
  %v598 = vadd.f32 %v596, 1.0
  %v599 = vrcp.pop %v597
  %v600 = vmul.f32 1.0, %v599
  %v601 = vrcp.pop %v598
  %v602 = vmul.f32 1.0, %v601
  %v603 = vmul.f32 %v600, 1.442695
  %v604 = vpow.pop %v603
  %v605 = vmul.f32 %v602, 1.442695
  %v606 = vpow.pop %v605
  %vm607 = vcmask 1042432
  %v608 = vsel %vm607, %v604, 0.0
  %v609 = vsel %vm607, %v606, 0.0
  %v610 = vadd.f32 %v608, %v609
  %611 = vadd.xlane.f32.xlu0 %v610
  %v612 = vpop.xlane.xlu0 %611
  %v613 = vrcp.pop %v612
  %v614 = vmul.f32 %v604, %v613
  %v615 = vmul.f32 %v606, %v613
  %v618 = vcombine.low %v614, %v615
  %620 = vst [vmem:[%s4] sm:$0x77] %v618
  // Predicated region
  $region18: #{_score_maps.1} parent=0 // pred_check
    _
  $region19: #{_score_maps.1} parent=0 // pred_check_branch
    %622 = sbr.rel (0) target = $region21
  $region20: #{_score_maps.1} parent=0 // pred_region
    _
  $region21: #{_score_maps.1} parent=0 // pred_fallthru
    _
  // Predicated region
  $region22: #{_score_maps.1} parent=0 // pred_check
    _
  $region23: #{_score_maps.1} parent=0 // pred_check_branch
    %624 = sbr.rel (0) target = $region25
  $region24: #{_score_maps.1} parent=0 // pred_region
    _
  $region25: #{_score_maps.1} parent=0 // pred_fallthru
    _

</llo_original>
